<compile_context>
chip_gen: v6e
topology: v6e:2x2x1
jax: 0.10.0
libtpu: 0.0.40
codegen_flags: <defaults>
</compile_context>

<pallas_src>
import functools

import jax
import jax.numpy as jnp
from jax.experimental import pallas as pl
from jax.experimental.pallas import tpu as pltpu


# ----------------------------- Pallas kernel --------------------------------
def _se_block_kernel(x_ref, wsq_ref, wout_ref, bout_ref, out_ref, x1_ref):
    # x block: (1, C, T)  -- channels on sublanes, pixels on lanes.
    c_in = x_ref.shape[1]
    t = x_ref.shape[2]
    k_pad = wsq_ref.shape[1]          # contracting dim, sublane-aligned
    co = x1_ref.shape[1]              # SQ output channels (= 4 * C)
    c_out = out_ref.shape[1]          # module output channels (= C)

    x = x_ref[0].astype(jnp.float32)                      # (C, T)

    # Append a ones row (folds the four SQ biases into the matmul) plus zero
    # rows up to the sublane-aligned contracting size K_pad.
    parts = [x, jnp.ones((1, t), jnp.float32)]
    if k_pad > c_in + 1:
        parts.append(jnp.zeros((k_pad - c_in - 1, t), jnp.float32))
    x_aug = jnp.concatenate(parts, axis=0)                # (K_pad, T)

    # ---- Stage 1: all four SQ branches in one MXU matmul --------------------
    s = jnp.dot(wsq_ref[...], x_aug,
                preferred_element_type=jnp.float32)       # (4*Co, T)
    s = jnp.maximum(s, 0.0)                               # per-branch ReLU
    x1 = (s[0 * co:1 * co] + s[1 * co:2 * co]
          + s[2 * co:3 * co] + s[3 * co:4 * co])          # branch sum (Co, T)
    x1_ref[0] = x1.astype(x1_ref.dtype)

    # ---- Stage 2: output 1x1 conv head on the MXU ----------------------------
    z = jnp.dot(wout_ref[...], x1,
                preferred_element_type=jnp.float32)       # (M_pad, T)
    z = jnp.maximum(z + bout_ref[...], 0.0)
    out_ref[0] = z[:c_out].astype(out_ref.dtype)


# ------------------------------ wrapper --------------------------------------
def _fold_bn(w, b, gamma, beta, mean, var, eps=1e-5):
    """Fold eval-mode BatchNorm into a channels-major 1x1 conv (C_out, C_in)."""
    scale = gamma / jnp.sqrt(var + eps)            # (C_out,)
    w_eff = w * scale[:, None]
    b_eff = (b - mean) * scale + beta
    return w_eff, b_eff


def _round_up(v, m):
    return ((v + m - 1) // m) * m


@functools.partial(jax.jit, static_argnames=("tile_hw_cap",))
def se_block_forward(x, params, tile_hw_cap=8192):
    """Forward of se_block. x is NCHW. Returns (output, x1) like the module."""
    assert tile_hw_cap % 128 == 0, "tile_hw_cap must be a multiple of 128"
    N, C, H, W = x.shape
    Co = params["sq0_w"].shape[0]                  # = 4 * C
    dtype = x.dtype
    hw = H * W

    # Fold eval-mode BN into the 1x1 convs and stack the four SQ branches into
    # one (4*Co, K_pad) matrix; the bias lives in column C (ones-row trick).
    k_pad = _round_up(C + 1, 8)
    wsq_all = jnp.zeros((4 * Co, k_pad), jnp.float32)
    for k in range(4):
        w, b = _fold_bn(params[f"sq{k}_w"], params[f"sq{k}_b"],
                        params[f"sq{k}_gamma"], params[f"sq{k}_beta"],
                        params[f"sq{k}_mean"], params[f"sq{k}_var"])
        wsq_all = wsq_all.at[k * Co:(k + 1) * Co, :C].set(w.astype(jnp.float32))
        wsq_all = wsq_all.at[k * Co:(k + 1) * Co, C].set(b.astype(jnp.float32))

    wout, bout = _fold_bn(params["out_w"], params["out_b"],
                          params["out_gamma"], params["out_beta"],
                          params["out_mean"], params["out_var"])
    m_pad = _round_up(C, 8)
    wout_all = jnp.zeros((m_pad, Co), jnp.float32).at[:C].set(
        wout.astype(jnp.float32))
    bout_all = jnp.zeros((m_pad, 1), jnp.float32).at[:C, 0].set(
        bout.astype(jnp.float32))

    # Channels-major view: NCHW -> (N, C, H*W).  No transposes, no padding.
    x3 = x.reshape(N, C, hw)

    # Fixed lane-dense pixel tile; the last (partial) block, if any, is masked
    # by Pallas on store, so no input pad / output slice passes are needed.
    # At t=8192 the per-step VMEM footprint is ~6 MiB (well under the 32 MiB
    # scoped default on all generations, incl. v7x's 64 MiB physical VMEM).
    t = min(tile_hw_cap, _round_up(hw, 128))
    grid = (N, pl.cdiv(hw, t))

    cost = pl.CostEstimate(
        flops=2 * N * hw * (4 * Co * (C + 1) + C * Co),
        transcendentals=0,
        bytes_accessed=x.dtype.itemsize * N * hw * (2 * C + Co)
        + 4 * (4 * Co * k_pad + m_pad * Co + m_pad))

    out3, x1_3 = pl.pallas_call(
        _se_block_kernel,
        out_shape=(jax.ShapeDtypeStruct((N, C, hw), dtype),
                   jax.ShapeDtypeStruct((N, Co, hw), dtype)),
        grid_spec=pltpu.PrefetchScalarGridSpec(
            num_scalar_prefetch=0,
            grid=grid,
            in_specs=[
                pl.BlockSpec((1, C, t), lambda n, i: (n, 0, i)),      # x tile
                pl.BlockSpec((4 * Co, k_pad), lambda n, i: (0, 0)),   # W_sq+bias
                pl.BlockSpec((m_pad, Co), lambda n, i: (0, 0)),       # W_out
                pl.BlockSpec((m_pad, 1), lambda n, i: (0, 0)),        # b_out
            ],
            out_specs=[
                pl.BlockSpec((1, C, t), lambda n, i: (n, 0, i)),      # output
                pl.BlockSpec((1, Co, t), lambda n, i: (n, 0, i)),     # x1
            ],
        ),
        compiler_params=pltpu.CompilerParams(
            dimension_semantics=("parallel", "parallel")),
        cost_estimate=cost,
    )(x3, wsq_all, wout_all, bout_all)

    return out3.reshape(N, C, H, W), x1_3.reshape(N, Co, H, W)


# ------------------------- reference (pure JAX) -------------------------------
def se_block_ref(x, params):
    xf = x.astype(jnp.float32)

    def conv1x1(inp, w, b):
        y = jnp.einsum("oc,nchw->nohw", w, inp,
                       precision=jax.lax.Precision.HIGHEST)
        return y + b[None, :, None, None]

    x1 = None
    for k in range(4):
        w, b = _fold_bn(params[f"sq{k}_w"], params[f"sq{k}_b"],
                        params[f"sq{k}_gamma"], params[f"sq{k}_beta"],
                        params[f"sq{k}_mean"], params[f"sq{k}_var"])
        y = jnp.maximum(conv1x1(xf, w, b), 0.0)
        x1 = y if x1 is None else x1 + y
    wo, bo = _fold_bn(params["out_w"], params["out_b"],
                      params["out_gamma"], params["out_beta"],
                      params["out_mean"], params["out_var"])
    out = jnp.maximum(conv1x1(x1, wo, bo), 0.0)
    return out.astype(x.dtype), x1.astype(x.dtype)


# --------------------------------- main ---------------------------------------
if __name__ == "__main__":
    C = 4                 # in_channels
    Co = 4 * C            # SQ expansion
    N, H, W = 2, 16, 16

    key = jax.random.PRNGKey(0)
    ks = jax.random.split(key, 32)

    def rnd(k, shape, scale=0.3):
        return scale * jax.random.normal(k, shape, dtype=jnp.float32)

    params = {}
    idx = 0
    for k in range(4):
        # 1x1 conv weights stored channels-major (C_out, C_in); bias (C_out,)
        params[f"sq{k}_w"] = rnd(ks[idx], (Co, C)); idx += 1
        params[f"sq{k}_b"] = rnd(ks[idx], (Co,)); idx += 1
        # BatchNorm (eval mode): gamma, beta, running_mean, running_var
        params[f"sq{k}_gamma"] = 1.0 + rnd(ks[idx], (Co,), 0.1); idx += 1
        params[f"sq{k}_beta"] = rnd(ks[idx], (Co,), 0.1); idx += 1
        params[f"sq{k}_mean"] = rnd(ks[idx], (Co,), 0.1); idx += 1
        params[f"sq{k}_var"] = 1.0 + jnp.abs(rnd(ks[idx], (Co,), 0.1)); idx += 1
    params["out_w"] = rnd(ks[idx], (C, Co)); idx += 1
    params["out_b"] = rnd(ks[idx], (C,)); idx += 1
    params["out_gamma"] = 1.0 + rnd(ks[idx], (C,), 0.1); idx += 1
    params["out_beta"] = rnd(ks[idx], (C,), 0.1); idx += 1
    params["out_mean"] = rnd(ks[idx], (C,), 0.1); idx += 1
    params["out_var"] = 1.0 + jnp.abs(rnd(ks[idx], (C,), 0.1)); idx += 1

    x = jax.random.normal(ks[30], (N, C, H, W), dtype=jnp.float32)

    out, x1 = se_block_forward(x, params)
    out = jax.block_until_ready(out)
    x1 = jax.block_until_ready(x1)

    ref_out, ref_x1 = se_block_ref(x, params)
    assert out.shape == (N, C, H, W), out.shape
    assert x1.shape == (N, Co, H, W), x1.shape
    # 1e-4 tolerance: the stage matmuls run as multi-pass f32 on the MXU, which
    # is not bit-identical to the VPU/HIGHEST-precision reference.
    assert jnp.allclose(out, ref_out, atol=1e-4, rtol=1e-4), \
        float(jnp.max(jnp.abs(out - ref_out)))
    assert jnp.allclose(x1, ref_x1, atol=1e-4, rtol=1e-4), \
        float(jnp.max(jnp.abs(x1 - ref_x1)))

    print("KERNEL_OK")
</pallas_src>

<mosaic_0001>
module attributes {stable_mosaic.version = 11 : i64} {
  func.func @_se_block_kernel(%arg0: i32, %arg1: i32, %arg2: memref<1x4x256xf32, #tpu.memory_space<vmem>>, %arg3: memref<64x8xf32, #tpu.memory_space<vmem>>, %arg4: memref<8x16xf32, #tpu.memory_space<vmem>>, %arg5: memref<8x1xf32, #tpu.memory_space<vmem>>, %arg6: memref<1x4x256xf32, #tpu.memory_space<vmem>>, %arg7: memref<1x16x256xf32, #tpu.memory_space<vmem>>) attributes {dimension_semantics = [#tpu.dimension_semantics<parallel>, #tpu.dimension_semantics<parallel>], iteration_bounds = array<i64: 2, 1>, scalar_prefetch = 0 : i64, scratch_operands = 0 : i64, tpu.core_type = #tpu.core_type<tc>, window_params = [{transform_indices = @transform_0, window_bounds = array<i64: 1, 4, 256>}, {pipeline_mode = #tpu.pipeline_mode<synchronous>, transform_indices = @transform_1, window_bounds = array<i64: 64, 8>}, {pipeline_mode = #tpu.pipeline_mode<synchronous>, transform_indices = @transform_2, window_bounds = array<i64: 8, 16>}, {pipeline_mode = #tpu.pipeline_mode<synchronous>, transform_indices = @transform_3, window_bounds = array<i64: 8, 1>}, {transform_indices = @transform_4, window_bounds = array<i64: 1, 4, 256>}, {transform_indices = @transform_5, window_bounds = array<i64: 1, 16, 256>}]} {
    %c0 = arith.constant 0 : index
    %c0_0 = arith.constant 0 : index
    %c0_1 = arith.constant 0 : index
    %0 = vector.load %arg2[%c0, %c0_0, %c0_1] : memref<1x4x256xf32, #tpu.memory_space<vmem>>, vector<1x4x256xf32>
    %1 = vector.shape_cast %0 : vector<1x4x256xf32> to vector<4x256xf32>
    %cst = arith.constant 1.000000e+00 : f32
    %2 = vector.broadcast %cst : f32 to vector<1x256xf32>
    %cst_2 = arith.constant 0.000000e+00 : f32
    %3 = vector.broadcast %cst_2 : f32 to vector<3x256xf32>
    %4 = tpu.concatenate %1, %2, %3 in 0 : vector<4x256xf32>, vector<1x256xf32>, vector<3x256xf32> -> vector<8x256xf32>
    %c0_3 = arith.constant 0 : index
    %c0_4 = arith.constant 0 : index
    %5 = vector.load %arg3[%c0_3, %c0_4] : memref<64x8xf32, #tpu.memory_space<vmem>>, vector<64x8xf32>
    %cst_5 = arith.constant dense<0.000000e+00> : vector<64x256xf32>
    %6 = tpu.matmul %5, %4, %cst_5 {dimension_numbers = #tpu.dot_dimension_numbers<[1], [0], [0], [1], [0, 0, 1, 1], [], []>} : vector<64x8xf32>, vector<8x256xf32>, vector<64x256xf32> -> vector<64x256xf32>
    %cst_6 = arith.constant 0.000000e+00 : f32
    %7 = vector.broadcast %cst_6 : f32 to vector<64x256xf32>
    %8 = arith.maximumf %6, %7 : vector<64x256xf32>
    %9 = vector.extract_strided_slice %8 {offsets = [0, 0], sizes = [16, 256], strides = [1, 1]} : vector<64x256xf32> to vector<16x256xf32>
    %10 = vector.extract_strided_slice %8 {offsets = [16, 0], sizes = [16, 256], strides = [1, 1]} : vector<64x256xf32> to vector<16x256xf32>
    %11 = arith.addf %9, %10 : vector<16x256xf32>
    %12 = vector.extract_strided_slice %8 {offsets = [32, 0], sizes = [16, 256], strides = [1, 1]} : vector<64x256xf32> to vector<16x256xf32>
    %13 = arith.addf %11, %12 : vector<16x256xf32>
    %14 = vector.extract_strided_slice %8 {offsets = [48, 0], sizes = [16, 256], strides = [1, 1]} : vector<64x256xf32> to vector<16x256xf32>
    %15 = arith.addf %13, %14 : vector<16x256xf32>
    %c0_7 = arith.constant 0 : index
    %c0_8 = arith.constant 0 : index
    %c0_9 = arith.constant 0 : index
    %16 = vector.load %arg7[%c0_7, %c0_8, %c0_9] : memref<1x16x256xf32, #tpu.memory_space<vmem>>, vector<1x16x256xf32>
    %17 = vector.shape_cast %16 : vector<1x16x256xf32> to vector<16x256xf32>
    %18 = vector.shape_cast %15 : vector<16x256xf32> to vector<1x16x256xf32>
    tpu.vector_store %arg7[%c0_7, %c0_8, %c0_9], %18 {strides = array<i32>} : memref<1x16x256xf32, #tpu.memory_space<vmem>>, vector<1x16x256xf32>,
    %c0_10 = arith.constant 0 : index
    %c0_11 = arith.constant 0 : index
    %19 = vector.load %arg4[%c0_10, %c0_11] : memref<8x16xf32, #tpu.memory_space<vmem>>, vector<8x16xf32>
    %cst_12 = arith.constant dense<0.000000e+00> : vector<8x256xf32>
    %20 = tpu.matmul %19, %15, %cst_12 {dimension_numbers = #tpu.dot_dimension_numbers<[1], [0], [0], [1], [0, 0, 1, 1], [], []>} : vector<8x16xf32>, vector<16x256xf32>, vector<8x256xf32> -> vector<8x256xf32>
    %c0_13 = arith.constant 0 : index
    %c0_14 = arith.constant 0 : index
    %21 = vector.load %arg5[%c0_13, %c0_14] : memref<8x1xf32, #tpu.memory_space<vmem>>, vector<8x1xf32>
    %22 = vector.broadcast %21 : vector<8x1xf32> to vector<8x256xf32>
    %23 = arith.addf %20, %22 : vector<8x256xf32>
    %cst_15 = arith.constant 0.000000e+00 : f32
    %24 = vector.broadcast %cst_15 : f32 to vector<8x256xf32>
    %25 = arith.maximumf %23, %24 : vector<8x256xf32>
    %26 = vector.extract_strided_slice %25 {offsets = [0, 0], sizes = [4, 256], strides = [1, 1]} : vector<8x256xf32> to vector<4x256xf32>
    %c0_16 = arith.constant 0 : index
    %c0_17 = arith.constant 0 : index
    %c0_18 = arith.constant 0 : index
    %27 = vector.load %arg6[%c0_16, %c0_17, %c0_18] : memref<1x4x256xf32, #tpu.memory_space<vmem>>, vector<1x4x256xf32>
    %28 = vector.shape_cast %27 : vector<1x4x256xf32> to vector<4x256xf32>
    %29 = vector.shape_cast %26 : vector<4x256xf32> to vector<1x4x256xf32>
    tpu.vector_store %arg6[%c0_16, %c0_17, %c0_18], %29 {strides = array<i32>} : memref<1x4x256xf32, #tpu.memory_space<vmem>>, vector<1x4x256xf32>,
    return
  }
  func.func @transform_0(%arg0: i32, %arg1: i32) -> (i32, i32, i32) {
    %c0_i32 = arith.constant 0 : i32
    %c0_i32_0 = arith.constant 0 : i32
    return %arg0, %c0_i32, %arg1 : i32, i32, i32
  }
  func.func @transform_1(%arg0: i32, %arg1: i32) -> (i32, i32) {
    %c0_i32 = arith.constant 0 : i32
    %c0_i32_0 = arith.constant 0 : i32
    %c0_i32_1 = arith.constant 0 : i32
    return %c0_i32, %c0_i32_0 : i32, i32
  }
  func.func @transform_2(%arg0: i32, %arg1: i32) -> (i32, i32) {
    %c0_i32 = arith.constant 0 : i32
    %c0_i32_0 = arith.constant 0 : i32
    %c0_i32_1 = arith.constant 0 : i32
    return %c0_i32, %c0_i32_0 : i32, i32
  }
  func.func @transform_3(%arg0: i32, %arg1: i32) -> (i32, i32) {
    %c0_i32 = arith.constant 0 : i32
    %c0_i32_0 = arith.constant 0 : i32
    %c0_i32_1 = arith.constant 0 : i32
    return %c0_i32, %c0_i32_0 : i32, i32
  }
  func.func @transform_4(%arg0: i32, %arg1: i32) -> (i32, i32, i32) {
    %c0_i32 = arith.constant 0 : i32
    %c0_i32_0 = arith.constant 0 : i32
    return %arg0, %c0_i32, %arg1 : i32, i32, i32
  }
  func.func @transform_5(%arg0: i32, %arg1: i32) -> (i32, i32, i32) {
    %c0_i32 = arith.constant 0 : i32
    %c0_i32_0 = arith.constant 0 : i32
    return %arg0, %c0_i32, %arg1 : i32, i32, i32
  }
}

</mosaic_0001>

<llo_original>
// kernel: se_block_forward.1
$region0: #{se_block_forward.1}
  #allocation0 [shape = 'u32[]', space=smem, size = 0x4, offset = 0x4, fixed_abs, tag = 'smem constant byte address 0x4 - core index']
  #allocation1 [shape = 'u32[144,128]{1,0:T(1,128)}', space=vmem, size = 0x12000, scoped, tag = 'internal scratch']
  %s0 = inlined_call_operand.vmem [shape: f32[2,4,256], index: 0, kind: input, shape index: {}]
  %s1 = inlined_call_operand.vmem [shape: f32[64,8], index: 1, kind: input, shape index: {}]
  %s2 = inlined_call_operand.vmem [shape: f32[8,16], index: 2, kind: input, shape index: {}]
  %s3 = inlined_call_operand.vmem [shape: f32[8,1], index: 3, kind: input, shape index: {}]
  %s4 = inlined_call_operand.vmem [shape: f32[2,4,256], index: 4, kind: output, shape index: {0}]
  %s5 = inlined_call_operand.vmem [shape: f32[2,16,256], index: 5, kind: output, shape index: {1}]
  %6 = xla_tuple %s4, %s5
  %s7 = sld [smem:[#allocation0]]
  $region57: #{se_block_forward.1} parent=0
    _
  %s9 = ssub.s32 1, %s7
  %s10 = scalar_select 0, %s9, %s7
  loop: start=0, step=1, limit=4
  $region2: #{se_block_forward.1} parent=0 // loop_pre_header
    _
  $region3: #{se_block_forward.1} parent=0 // loop_header
    %s12 = sphi 0, %s16
    %p13 = scmp.ge.s32.totalorder %s12, 4
    %s19 = sphi 0, %s31
    %s20 = sphi 0, %s27
    %s21 = sphi 0, %s19
    %s22 = sphi 0, %s20
    %s23 = sphi 0, %s21
    %s24 = sphi 0, %s22
    %s36 = sphi 0, %s38
    %s39 = sphi 0, %s36
    %s40 = sphi 0, %s39
    %s56 = sphi 0, %s40
    %s60 = sphi 0, %s60
    %s62 = sphi 0, %s60
    %s63 = sphi 0, %s62
    %s77 = sphi 0, %s63
    %s81 = sphi 0, %s81
    %s83 = sphi 0, %s81
    %s84 = sphi 0, %s83
    %s98 = sphi 0, %s84
    %s102 = sphi 0, %s102
    %s104 = sphi 0, %s102
    %s105 = sphi 0, %s104
    %s119 = sphi 0, %s105
    %s127 = sphi 0, %s129
    %s130 = sphi 0, %s127
    %s131 = sphi 0, %s130
    %s147 = sphi 0, %s131
    %s155 = sphi 0, %s157
    %s158 = sphi 0, %s155
    %s159 = sphi 0, %s158
    %s175 = sphi 0, %s159
  $region4: #{se_block_forward.1} parent=0 // loop_header_branch
    %15 = sbr.rel (%p13) target = $region8
  $region5: #{se_block_forward.1} parent=0 // loop_body
    %s17 = ssub.s32 %s12, 1
    %s18 = ssub.s32 %s12, 2
    %s25 = sadd.s32 1, %s20
    %p26 = scmp.ge.s32.totalorder %s25, 1
    %s27 = scalar_select %p26, 0, %s25
    %s28 = sadd.s32 1, %s19
    %s29 = scalar_select %p26, %s28, %s19
    %p30 = scmp.ge.s32.totalorder %s29, 2
    %s31 = scalar_select %p30, 0, %s29
    %s32 = ssub.s32 %s19, %s31
    %s33 = ssub.s32 %s20, %s27
    %s34 = sor.u32 %s32, %s33
    %p35 = scmp.eq.s32.totalorder %s34, 0
    %s37 = sadd.s32 %s36, 1
    %s38 = scalar_select %p35, %s36, %s37
    %p41 = pneg %p35
    %p42 = scmp.eq.s32.totalorder %s12, 1
    %p43 = por %p41, %p42
    %p44 = scmp.ne.s32.totalorder %s36, %s39
    %p45 = scmp.eq.s32.totalorder %s12, 0
    %p46 = por %p44, %p45
    %p47 = scmp.ne.s32.totalorder %s36, %s39
    %p48 = scmp.eq.s32.totalorder %s17, 1
    %p49 = por %p47, %p48
    %p50 = scmp.ne.s32.totalorder %s39, %s40
    %p51 = scmp.eq.s32.totalorder %s17, 0
    %p52 = por %p50, %p51
    %p53 = scmp.ne.s32.totalorder %s39, %s40
    %p54 = scmp.eq.s32.totalorder %s18, 1
    %p55 = por %p53, %p54
    %p57 = scmp.ne.s32.totalorder %s40, %s56
    %p58 = scmp.eq.s32.totalorder %s18, 0
    %p59 = por %p57, %p58
    %s61 = sadd.s32 %s60, 1
    %p64 = scmp.eq.s32.totalorder %s12, 1
    %p65 = scmp.ne.s32.totalorder %s60, %s62
    %p66 = scmp.eq.s32.totalorder %s12, 0
    %p67 = por %p65, %p66
    %p68 = scmp.ne.s32.totalorder %s60, %s62
    %p69 = scmp.eq.s32.totalorder %s17, 1
    %p70 = por %p68, %p69
    %p71 = scmp.ne.s32.totalorder %s62, %s63
    %p72 = scmp.eq.s32.totalorder %s17, 0
    %p73 = por %p71, %p72
    %p74 = scmp.ne.s32.totalorder %s62, %s63
    %p75 = scmp.eq.s32.totalorder %s18, 1
    %p76 = por %p74, %p75
    %p78 = scmp.ne.s32.totalorder %s63, %s77
    %p79 = scmp.eq.s32.totalorder %s18, 0
    %p80 = por %p78, %p79
    %s82 = sadd.s32 %s81, 1
    %p85 = scmp.eq.s32.totalorder %s12, 1
    %p86 = scmp.ne.s32.totalorder %s81, %s83
    %p87 = scmp.eq.s32.totalorder %s12, 0
    %p88 = por %p86, %p87
    %p89 = scmp.ne.s32.totalorder %s81, %s83
    %p90 = scmp.eq.s32.totalorder %s17, 1
    %p91 = por %p89, %p90
    %p92 = scmp.ne.s32.totalorder %s83, %s84
    %p93 = scmp.eq.s32.totalorder %s17, 0
    %p94 = por %p92, %p93
    %p95 = scmp.ne.s32.totalorder %s83, %s84
    %p96 = scmp.eq.s32.totalorder %s18, 1
    %p97 = por %p95, %p96
    %p99 = scmp.ne.s32.totalorder %s84, %s98
    %p100 = scmp.eq.s32.totalorder %s18, 0
    %p101 = por %p99, %p100
    %s103 = sadd.s32 %s102, 1
    %p106 = scmp.eq.s32.totalorder %s12, 1
    %p107 = scmp.ne.s32.totalorder %s102, %s104
    %p108 = scmp.eq.s32.totalorder %s12, 0
    %p109 = por %p107, %p108
    %p110 = scmp.ne.s32.totalorder %s102, %s104
    %p111 = scmp.eq.s32.totalorder %s17, 1
    %p112 = por %p110, %p111
    %p113 = scmp.ne.s32.totalorder %s104, %s105
    %p114 = scmp.eq.s32.totalorder %s17, 0
    %p115 = por %p113, %p114
    %p116 = scmp.ne.s32.totalorder %s104, %s105
    %p117 = scmp.eq.s32.totalorder %s18, 1
    %p118 = por %p116, %p117
    %p120 = scmp.ne.s32.totalorder %s105, %s119
    %p121 = scmp.eq.s32.totalorder %s18, 0
    %p122 = por %p120, %p121
    %s123 = ssub.s32 %s19, %s31
    %s124 = ssub.s32 %s20, %s27
    %s125 = sor.u32 %s123, %s124
    %p126 = scmp.eq.s32.totalorder %s125, 0
    %s128 = sadd.s32 %s127, 1
    %s129 = scalar_select %p126, %s127, %s128
    %p132 = pneg %p126
    %p133 = scmp.eq.s32.totalorder %s12, 1
    %p134 = por %p132, %p133
    %p135 = scmp.ne.s32.totalorder %s127, %s130
    %p136 = scmp.eq.s32.totalorder %s12, 0
    %p137 = por %p135, %p136
    %p138 = scmp.ne.s32.totalorder %s127, %s130
    %p139 = scmp.eq.s32.totalorder %s17, 1
    %p140 = por %p138, %p139
    %p141 = scmp.ne.s32.totalorder %s130, %s131
    %p142 = scmp.eq.s32.totalorder %s17, 0
    %p143 = por %p141, %p142
    %p144 = scmp.ne.s32.totalorder %s130, %s131
    %p145 = scmp.eq.s32.totalorder %s18, 1
    %p146 = por %p144, %p145
    %p148 = scmp.ne.s32.totalorder %s131, %s147
    %p149 = scmp.eq.s32.totalorder %s18, 0
    %p150 = por %p148, %p149
    %s151 = ssub.s32 %s19, %s31
    %s152 = ssub.s32 %s20, %s27
    %s153 = sor.u32 %s151, %s152
    %p154 = scmp.eq.s32.totalorder %s153, 0
    %s156 = sadd.s32 %s155, 1
    %s157 = scalar_select %p154, %s155, %s156
    %p160 = pneg %p154
    %p161 = scmp.eq.s32.totalorder %s12, 1
    %p162 = por %p160, %p161
    %p163 = scmp.ne.s32.totalorder %s155, %s158
    %p164 = scmp.eq.s32.totalorder %s12, 0
    %p165 = por %p163, %p164
    %p166 = scmp.ne.s32.totalorder %s155, %s158
    %p167 = scmp.eq.s32.totalorder %s17, 1
    %p168 = por %p166, %p167
    %p169 = scmp.ne.s32.totalorder %s158, %s159
    %p170 = scmp.eq.s32.totalorder %s17, 0
    %p171 = por %p169, %p170
    %p172 = scmp.ne.s32.totalorder %s158, %s159
    %p173 = scmp.eq.s32.totalorder %s18, 1
    %p174 = por %p172, %p173
    %p176 = scmp.ne.s32.totalorder %s159, %s175
    %p177 = scmp.eq.s32.totalorder %s18, 0
    %p178 = por %p176, %p177
    %p179 = scmp.le.s32.totalorder 1, %s12
    %p180 = scmp.lt.s32.totalorder %s12, 3
    %p181 = pnand %p179, %p180
    %p182 = pneg %p181
    // Predicated region
    $region9: #{se_block_forward.1} parent=5 // pred_check
      _
    $region10: #{se_block_forward.1} parent=5 // pred_check_branch
      %184 = sbr.rel (%p181) target = $region12
    $region11: #{se_block_forward.1} parent=5 // pred_region
      %s185 = ssub.s32 %s12, 1
      // Predicated region
      $region13: #{se_block_forward.1} parent=11 // pred_check
        %p186 = pneg %p73
      $region14: #{se_block_forward.1} parent=11 // pred_check_branch
        %188 = sbr.rel (%p186) target = $region16
      $region15: #{se_block_forward.1} parent=11 // pred_region
        _
      $region16: #{se_block_forward.1} parent=11 // pred_fallthru
        _
      // Predicated region
      $region17: #{se_block_forward.1} parent=11 // pred_check
        %p189 = pneg %p94
      $region18: #{se_block_forward.1} parent=11 // pred_check_branch
        %191 = sbr.rel (%p189) target = $region20
      $region19: #{se_block_forward.1} parent=11 // pred_region
        _
      $region20: #{se_block_forward.1} parent=11 // pred_fallthru
        _
      // Predicated region
      $region21: #{se_block_forward.1} parent=11 // pred_check
        %p192 = pneg %p115
      $region22: #{se_block_forward.1} parent=11 // pred_check_branch
        %194 = sbr.rel (%p192) target = $region24
      $region23: #{se_block_forward.1} parent=11 // pred_region
        _
      $region24: #{se_block_forward.1} parent=11 // pred_fallthru
        _
    $region12: #{se_block_forward.1} parent=5 // pred_fallthru
      _
    %p195 = scmp.lt.s32.totalorder %s12, 2
    // Predicated region
    $region25: #{se_block_forward.1} parent=5 // pred_check
      %p196 = pneg %p195
    $region26: #{se_block_forward.1} parent=5 // pred_check_branch
      %198 = sbr.rel (%p196) target = $region28
    $region27: #{se_block_forward.1} parent=5 // pred_region
      // Predicated region
      $region29: #{se_block_forward.1} parent=27 // pred_check
        %p199 = pneg %p46
      $region30: #{se_block_forward.1} parent=27 // pred_check_branch
        %201 = sbr.rel (%p199) target = $region32
      $region31: #{se_block_forward.1} parent=27 // pred_region
        %s202 = smul.u32 2, %s20
        %p203 = scmp.lt.s32.totalorder %s19, 1
        %s204 = scalar_select %p203, %s19, 1
        %p205 = scmp.lt.s32.totalorder %s202, 1
        %s206 = scalar_select %p205, %s202, 1
        %s207 = smul.addr %s204, 2
        %s208 = sadd.s32 %s206, %s207
        %s209 = smul.addr %s208, 4
        %s210 = scalar_lea.vmem %s0, %s209
        %s211 = smul.u32 2, %s20
      $region32: #{se_block_forward.1} parent=27 // pred_fallthru
        _
    $region28: #{se_block_forward.1} parent=5 // pred_fallthru
      _
    %p212 = scmp.le.s32.totalorder 1, %s12
    %p213 = scmp.lt.s32.totalorder %s12, 3
    %p214 = pnand %p212, %p213
    %p215 = pneg %p214
    // Predicated region
    $region33: #{se_block_forward.1} parent=5 // pred_check
      _
    $region34: #{se_block_forward.1} parent=5 // pred_check_branch
      %217 = sbr.rel (%p214) target = $region36
    $region35: #{se_block_forward.1} parent=5 // pred_region
      %s218 = ssub.s32 %s12, 1
      %s219 = smul.u32 2, %s22
      %p220 = scmp.lt.s32.totalorder %s21, 1
      %s221 = scalar_select %p220, %s21, 1
      %p222 = scmp.lt.s32.totalorder %s219, 1
      %s223 = scalar_select %p222, %s219, 1
      %s224 = smul.addr %s221, 2
      %s225 = sadd.s32 %s223, %s224
      %s226 = smul.addr %s225, 4
      %s227 = scalar_lea.vmem %s0, %s226
      %p228 = pneg %p52
      %p229 = pneg %p49
      %p230 = pneg %p73
      %p231 = pneg %p70
      %p232 = pneg %p94
      %p233 = pneg %p91
      %p234 = pneg %p115
      %p235 = pneg %p112
      %p236 = pneg %p143
      %p237 = pneg %p140
      %s238 = smul.u32 2, %s22
      %p239 = scmp.lt.s32.totalorder %s21, 1
      %s240 = scalar_select %p239, %s21, 1
      %p241 = scmp.lt.s32.totalorder %s238, 1
      %s242 = scalar_select %p241, %s238, 1
      %s243 = smul.addr %s240, 2
      %s244 = sadd.s32 %s242, %s243
      %s245 = smul.addr %s244, 4
      %s246 = scalar_lea.vmem %s4, %s245
      %p247 = pneg %p171
      %p248 = pneg %p168
      %s249 = smul.u32 2, %s22
      %p250 = scmp.lt.s32.totalorder %s21, 1
      %s251 = scalar_select %p250, %s21, 1
      %p252 = scmp.lt.s32.totalorder %s249, 1
      %s253 = scalar_select %p252, %s249, 1
      %s254 = smul.addr %s251, 4
      %s255 = sadd.s32 %s253, %s254
      %s256 = smul.addr %s255, 8
      %s257 = scalar_lea.vmem %s5, %s256
      %s258 = smul.u32 2, %s22
      %p259 = scmp.lt.s32.totalorder %s21, 1
      %s260 = scalar_select %p259, %s21, 1
      %p261 = scmp.lt.s32.totalorder %s258, 1
      %s262 = scalar_select %p261, %s258, 1
      %s263 = smul.addr %s260, 2
      %s264 = sadd.s32 %s262, %s263
      %s265 = smul.addr %s264, 4
      %s266 = scalar_lea.vmem %s0, %s265
      %s267 = smul.u32 2, %s22
      %s268 = smul.u32 2, %s22
      %p269 = scmp.lt.s32.totalorder %s21, 1
      %s270 = scalar_select %p269, %s21, 1
      %p271 = scmp.lt.s32.totalorder %s268, 1
      %s272 = scalar_select %p271, %s268, 1
      %s273 = smul.addr %s270, 2
      %s274 = sadd.s32 %s272, %s273
      %s275 = smul.addr %s274, 4
      %s276 = scalar_lea.vmem %s4, %s275
      %s277 = smul.u32 2, %s22
      %s278 = smul.u32 2, %s22
      %p279 = scmp.lt.s32.totalorder %s21, 1
      %s280 = scalar_select %p279, %s21, 1
      %p281 = scmp.lt.s32.totalorder %s278, 1
      %s282 = scalar_select %p281, %s278, 1
      %s283 = smul.addr %s280, 4
      %s284 = sadd.s32 %s282, %s283
      %s285 = smul.addr %s284, 8
      %s286 = scalar_lea.vmem %s5, %s285
      %s287 = smul.u32 2, %s22
      %v288 = vld [vmem:[%s266] sm:$0xff]
      %v290 = vcombine.high %v288, %v288
      %vm292 = vcmask 1043456
      %v293 = vsel %vm292, %v288, 1.0
      %v294 = vsel %vm292, %v290, 1.0
      %vm295 = vcmask 1044480
      %v296 = vsel %vm295, %v293, 0.0
      %v297 = vsel %vm295, %v294, 0.0
      %v298 = vld [vmem:[%s1] sm:$0xff]
      %v299 = vld [vmem:[%s1 + $0x8] sm:$0xff]
      %v300 = vld [vmem:[%s1 + $0x10] sm:$0xff]
      %v301 = vld [vmem:[%s1 + $0x18] sm:$0xff]
      %v302 = vld [vmem:[%s1 + $0x20] sm:$0xff]
      %v303 = vld [vmem:[%s1 + $0x28] sm:$0xff]
      %v304 = vld [vmem:[%s1 + $0x30] sm:$0xff]
      %v305 = vld [vmem:[%s1 + $0x38] sm:$0xff]
      %vm306 = vcmask 64512
      %v308 = vsel %vm306, %v298, 0
      %v311 = vsel %vm306, %v299, 0
      %v314 = vsel %vm306, %v300, 0
      %v317 = vsel %vm306, %v301, 0
      %v320 = vsel %vm306, %v302, 0
      %v323 = vsel %vm306, %v303, 0
      %v326 = vsel %vm306, %v304, 0
      %v329 = vsel %vm306, %v305, 0
      %331 = vmatprep.subr.mxu0 0.0
      %332 = vmatpush1.msra.mxu0 0.0
      %333 = vmatprep.subr.mxu0 0.0
      %334 = vmatpush1.msra.mxu0 0.0
      %335 = vmatprep.subr.mxu0 0.0
      %336 = vmatpush1.msra.mxu0 0.0
      %337 = vmatprep.subr.mxu0 0.0
      %338 = vmatpush1.msra.mxu0 0.0
      %339 = vmatprep.subr.mxu0 0.0
      %340 = vmatpush1.msra.mxu0 0.0
      %341 = vmatprep.subr.mxu0 0.0
      %342 = vmatpush1.msra.mxu0 0.0
      %343 = vmatprep.subr.mxu0 0.0
      %344 = vmatpush1.msra.mxu0 0.0
      %345 = vmatprep.subr.mxu0 0.0
      %346 = vmatpush1.msra.mxu0 0.0
      %347 = vmatprep.subr.mxu0 0.0
      %348 = vmatpush1.msra.mxu0 0.0
      %349 = vmatprep.subr.mxu0 0.0
      %350 = vmatpush1.msra.mxu0 0.0
      %351 = vmatprep.subr.mxu0 0.0
      %352 = vmatpush1.msra.mxu0 0.0
      %353 = vmatprep.subr.mxu0 0.0
      %354 = vmatpush1.msra.mxu0 0.0
      %355 = vmatprep.subr.mxu0 0.0
      %356 = vmatpush1.msra.mxu0 0.0
      %357 = vmatprep.subr.mxu0 0.0
      %358 = vmatpush1.msra.mxu0 0.0
      %359 = vmatprep.subr.mxu0 0.0
      %360 = vmatpush1.msra.mxu0 0.0
      %361 = vmatprep.subr.mxu0 %v297
      %362 = vmatpush1.msra.mxu0 %v296
      %363 = vmatprep.subr.mxu0 0.0
      %364 = vmatpush2.msra.mxu0 0.0
      %365 = vmatprep.subr.mxu0 0.0
      %366 = vmatpush2.msra.mxu0 0.0
      %367 = vmatprep.subr.mxu0 0.0
      %368 = vmatpush2.msra.mxu0 0.0
      %369 = vmatprep.subr.mxu0 0.0
      %370 = vmatpush2.msra.mxu0 0.0
      %371 = vmatprep.subr.mxu0 0.0
      %372 = vmatpush2.msra.mxu0 0.0
      %373 = vmatprep.subr.mxu0 0.0
      %374 = vmatpush2.msra.mxu0 0.0
      %375 = vmatprep.subr.mxu0 0.0
      %376 = vmatpush2.msra.mxu0 0.0
      %377 = vmatprep.subr.mxu0 0.0
      %378 = vmatpush2.msra.mxu0 0.0
      %379 = vmatprep.subr.mxu0 0.0
      %380 = vmatpush2.msra.mxu0 0.0
      %381 = vmatprep.subr.mxu0 0.0
      %382 = vmatpush2.msra.mxu0 0.0
      %383 = vmatprep.subr.mxu0 0.0
      %384 = vmatpush2.msra.mxu0 0.0
      %385 = vmatprep.subr.mxu0 0.0
      %386 = vmatpush2.msra.mxu0 0.0
      %387 = vmatprep.subr.mxu0 0.0
      %388 = vmatpush2.msra.mxu0 0.0
      %389 = vmatprep.subr.mxu0 0.0
      %390 = vmatpush2.msra.mxu0 0.0
      %391 = vmatprep.subr.mxu0 0.0
      %392 = vmatpush2.msra.mxu0 0.0
      %393 = vmatprep.subr.mxu0 0.0
      %394 = vmatpush2.msra.mxu0 0.0
      %395 = vmatprep.mubr.f32.mxu0 0.0
      %396 = vmatmul.mubr.f32.gmra.mxu0 %v308
      %v397 = vpop.f32.mrf.mxu0
      %v398 = vadd.f32 0.0, %v397
      %v399 = vpop.f32.mrf.mxu0
      %v400 = vadd.f32 0.0, %v399
      %401 = vmatprep.mubr.f32.mxu0 0.0
      %402 = vmatmul.mubr.f32.gmra.mxu0 %v311
      %v403 = vpop.f32.mrf.mxu0
      %v404 = vadd.f32 0.0, %v403
      %v405 = vpop.f32.mrf.mxu0
      %v406 = vadd.f32 0.0, %v405
      %407 = vmatprep.mubr.f32.mxu0 0.0
      %408 = vmatmul.mubr.f32.gmra.mxu0 %v314
      %v409 = vpop.f32.mrf.mxu0
      %v410 = vadd.f32 0.0, %v409
      %v411 = vpop.f32.mrf.mxu0
      %v412 = vadd.f32 0.0, %v411
      %413 = vmatprep.mubr.f32.mxu0 0.0
      %414 = vmatmul.mubr.f32.gmra.mxu0 %v317
      %v415 = vpop.f32.mrf.mxu0
      %v416 = vadd.f32 0.0, %v415
      %v417 = vpop.f32.mrf.mxu0
      %v418 = vadd.f32 0.0, %v417
      %419 = vmatprep.mubr.f32.mxu0 0.0
      %420 = vmatmul.mubr.f32.gmra.mxu0 %v320
      %v421 = vpop.f32.mrf.mxu0
      %v422 = vadd.f32 0.0, %v421
      %v423 = vpop.f32.mrf.mxu0
      %v424 = vadd.f32 0.0, %v423
      %425 = vmatprep.mubr.f32.mxu0 0.0
      %426 = vmatmul.mubr.f32.gmra.mxu0 %v323
      %v427 = vpop.f32.mrf.mxu0
      %v428 = vadd.f32 0.0, %v427
      %v429 = vpop.f32.mrf.mxu0
      %v430 = vadd.f32 0.0, %v429
      %431 = vmatprep.mubr.f32.mxu0 0.0
      %432 = vmatmul.mubr.f32.gmra.mxu0 %v326
      %v433 = vpop.f32.mrf.mxu0
      %v434 = vadd.f32 0.0, %v433
      %v435 = vpop.f32.mrf.mxu0
      %v436 = vadd.f32 0.0, %v435
      %437 = vmatprep.mubr.f32.mxu0 0.0
      %438 = vmatmul.mubr.f32.gmra.mxu0 %v329
      %v439 = vpop.f32.mrf.mxu0
      %v440 = vadd.f32 0.0, %v439
      %v441 = vpop.f32.mrf.mxu0
      %v442 = vadd.f32 0.0, %v441
      %443 = vdwg.mxu0
      %v444 = vmax.f32 %v398, 0.0
      %v445 = vmax.f32 %v400, 0.0
      %v446 = vmax.f32 %v404, 0.0
      %v447 = vmax.f32 %v406, 0.0
      %v448 = vmax.f32 %v410, 0.0
      %v449 = vmax.f32 %v412, 0.0
      %v450 = vmax.f32 %v416, 0.0
      %v451 = vmax.f32 %v418, 0.0
      %v452 = vmax.f32 %v422, 0.0
      %v453 = vmax.f32 %v424, 0.0
      %v454 = vmax.f32 %v428, 0.0
      %v455 = vmax.f32 %v430, 0.0
      %v456 = vmax.f32 %v434, 0.0
      %v457 = vmax.f32 %v436, 0.0
      %v458 = vmax.f32 %v440, 0.0
      %v459 = vmax.f32 %v442, 0.0
      %v460 = vadd.f32 %v444, %v448
      %v461 = vadd.f32 %v445, %v449
      %v462 = vadd.f32 %v446, %v450
      %v463 = vadd.f32 %v447, %v451
      %v464 = vadd.f32 %v460, %v452
      %v465 = vadd.f32 %v461, %v453
      %v466 = vadd.f32 %v462, %v454
      %v467 = vadd.f32 %v463, %v455
      %v468 = vadd.f32 %v464, %v456
      %v469 = vadd.f32 %v465, %v457
      %v470 = vadd.f32 %v466, %v458
      %v471 = vadd.f32 %v467, %v459
      %472 = vst [vmem:[%s286] sm:$0xff] %v468
      %473 = vst [vmem:[%s286 + $0x8] sm:$0xff] %v469
      %474 = vst [vmem:[%s286 + $0x10] sm:$0xff] %v470
      %475 = vst [vmem:[%s286 + $0x18] sm:$0xff] %v471
      %v476 = vld [vmem:[%s2] sm:$0xff]
      %v477 = vld [vmem:[%s3] sm:$0xff]
      %479 = vset.pattern.permute.xlu0 0
      %480 = vperm.xlu0 %479, %v477
      %v481 = vpop.permute.xlu0 %480
      %vm483 = vcmask 130048
      %v485 = vsel %vm483, %v476, 0
      %487 = vmatprep.subr.mxu0 0.0
      %488 = vmatpush1.msra.mxu0 0.0
      %489 = vmatprep.subr.mxu0 0.0
      %490 = vmatpush1.msra.mxu0 0.0
      %491 = vmatprep.subr.mxu0 0.0
      %492 = vmatpush1.msra.mxu0 0.0
      %493 = vmatprep.subr.mxu0 0.0
      %494 = vmatpush1.msra.mxu0 0.0
      %495 = vmatprep.subr.mxu0 0.0
      %496 = vmatpush1.msra.mxu0 0.0
      %497 = vmatprep.subr.mxu0 0.0
      %498 = vmatpush1.msra.mxu0 0.0
      %499 = vmatprep.subr.mxu0 0.0
      %500 = vmatpush1.msra.mxu0 0.0
      %501 = vmatprep.subr.mxu0 0.0
      %502 = vmatpush1.msra.mxu0 0.0
      %503 = vmatprep.subr.mxu0 0.0
      %504 = vmatpush1.msra.mxu0 0.0
      %505 = vmatprep.subr.mxu0 0.0
      %506 = vmatpush1.msra.mxu0 0.0
      %507 = vmatprep.subr.mxu0 0.0
      %508 = vmatpush1.msra.mxu0 0.0
      %509 = vmatprep.subr.mxu0 0.0
      %510 = vmatpush1.msra.mxu0 0.0
      %511 = vmatprep.subr.mxu0 0.0
      %512 = vmatpush1.msra.mxu0 0.0
      %513 = vmatprep.subr.mxu0 0.0
      %514 = vmatpush1.msra.mxu0 0.0
      %515 = vmatprep.subr.mxu0 %v471
      %516 = vmatpush1.msra.mxu0 %v470
      %517 = vmatprep.subr.mxu0 %v469
      %518 = vmatpush1.msra.mxu0 %v468
      %519 = vmatprep.subr.mxu0 0.0
      %520 = vmatpush2.msra.mxu0 0.0
      %521 = vmatprep.subr.mxu0 0.0
      %522 = vmatpush2.msra.mxu0 0.0
      %523 = vmatprep.subr.mxu0 0.0
      %524 = vmatpush2.msra.mxu0 0.0
      %525 = vmatprep.subr.mxu0 0.0
      %526 = vmatpush2.msra.mxu0 0.0
      %527 = vmatprep.subr.mxu0 0.0
      %528 = vmatpush2.msra.mxu0 0.0
      %529 = vmatprep.subr.mxu0 0.0
      %530 = vmatpush2.msra.mxu0 0.0
      %531 = vmatprep.subr.mxu0 0.0
      %532 = vmatpush2.msra.mxu0 0.0
      %533 = vmatprep.subr.mxu0 0.0
      %534 = vmatpush2.msra.mxu0 0.0
      %535 = vmatprep.subr.mxu0 0.0
      %536 = vmatpush2.msra.mxu0 0.0
      %537 = vmatprep.subr.mxu0 0.0
      %538 = vmatpush2.msra.mxu0 0.0
      %539 = vmatprep.subr.mxu0 0.0
      %540 = vmatpush2.msra.mxu0 0.0
      %541 = vmatprep.subr.mxu0 0.0
      %542 = vmatpush2.msra.mxu0 0.0
      %543 = vmatprep.subr.mxu0 0.0
      %544 = vmatpush2.msra.mxu0 0.0
      %545 = vmatprep.subr.mxu0 0.0
      %546 = vmatpush2.msra.mxu0 0.0
      %547 = vmatprep.subr.mxu0 0.0
      %548 = vmatpush2.msra.mxu0 0.0
      %549 = vmatprep.subr.mxu0 0.0
      %550 = vmatpush2.msra.mxu0 0.0
      %551 = vmatprep.mubr.f32.mxu0 0.0
      %552 = vmatmul.mubr.f32.gmra.mxu0 %v485
      %v553 = vpop.f32.mrf.mxu0
      %v554 = vadd.f32 %v481, %v553
      %v555 = vpop.f32.mrf.mxu0
      %v556 = vadd.f32 %v481, %v555
      %557 = vdwg.mxu0
      %v558 = vmax.f32 %v554, 0.0
      %v559 = vmax.f32 %v556, 0.0
      %v562 = vcombine.low %v558, %v559
      %564 = vst [vmem:[%s276] sm:$0xff] %v562
      %s565 = smul.u32 2, %s22
      %p566 = scmp.lt.s32.totalorder %s21, 1
      %s567 = scalar_select %p566, %s21, 1
      %p568 = scmp.lt.s32.totalorder %s565, 1
      %s569 = scalar_select %p568, %s565, 1
      %s570 = smul.addr %s567, 2
      %s571 = sadd.s32 %s569, %s570
      %s572 = smul.addr %s571, 4
      %s573 = scalar_lea.vmem %s4, %s572
      %s574 = smul.u32 2, %s22
      %p575 = scmp.lt.s32.totalorder %s21, 1
      %s576 = scalar_select %p575, %s21, 1
      %p577 = scmp.lt.s32.totalorder %s574, 1
      %s578 = scalar_select %p577, %s574, 1
      %s579 = smul.addr %s576, 4
      %s580 = sadd.s32 %s578, %s579
      %s581 = smul.addr %s580, 8
      %s582 = scalar_lea.vmem %s5, %s581
      // Predicated region
      $region37: #{se_block_forward.1} parent=35 // pred_check
        %p583 = pneg %p140
      $region38: #{se_block_forward.1} parent=35 // pred_check_branch
        %585 = sbr.rel (%p583) target = $region40
      $region39: #{se_block_forward.1} parent=35 // pred_region
        %s586 = smul.u32 2, %s22
      $region40: #{se_block_forward.1} parent=35 // pred_fallthru
        _
      // Predicated region
      $region41: #{se_block_forward.1} parent=35 // pred_check
        %p587 = pneg %p168
      $region42: #{se_block_forward.1} parent=35 // pred_check_branch
        %589 = sbr.rel (%p587) target = $region44
      $region43: #{se_block_forward.1} parent=35 // pred_region
        %s590 = smul.u32 2, %s22
      $region44: #{se_block_forward.1} parent=35 // pred_fallthru
        _
    $region36: #{se_block_forward.1} parent=5 // pred_fallthru
      _
    %p591 = scmp.le.s32.totalorder 2, %s12
    // Predicated region
    $region45: #{se_block_forward.1} parent=5 // pred_check
      %p592 = pneg %p591
    $region46: #{se_block_forward.1} parent=5 // pred_check_branch
      %594 = sbr.rel (%p592) target = $region48
    $region47: #{se_block_forward.1} parent=5 // pred_region
      %s595 = ssub.s32 %s12, 2
      // Predicated region
      $region49: #{se_block_forward.1} parent=47 // pred_check
        %p596 = pneg %p146
      $region50: #{se_block_forward.1} parent=47 // pred_check_branch
        %598 = sbr.rel (%p596) target = $region52
      $region51: #{se_block_forward.1} parent=47 // pred_region
        %s599 = smul.u32 2, %s24
        %p600 = scmp.lt.s32.totalorder %s23, 1
        %s601 = scalar_select %p600, %s23, 1
        %p602 = scmp.lt.s32.totalorder %s599, 1
        %s603 = scalar_select %p602, %s599, 1
        %s604 = smul.addr %s601, 2
        %s605 = sadd.s32 %s603, %s604
        %s606 = smul.addr %s605, 4
        %s607 = scalar_lea.vmem %s4, %s606
      $region52: #{se_block_forward.1} parent=47 // pred_fallthru
        _
      // Predicated region
      $region53: #{se_block_forward.1} parent=47 // pred_check
        %p608 = pneg %p174
      $region54: #{se_block_forward.1} parent=47 // pred_check_branch
        %610 = sbr.rel (%p608) target = $region56
      $region55: #{se_block_forward.1} parent=47 // pred_region
        %s611 = smul.u32 2, %s24
        %p612 = scmp.lt.s32.totalorder %s23, 1
        %s613 = scalar_select %p612, %s23, 1
        %p614 = scmp.lt.s32.totalorder %s611, 1
        %s615 = scalar_select %p614, %s611, 1
        %s616 = smul.addr %s613, 4
        %s617 = sadd.s32 %s615, %s616
        %s618 = smul.addr %s617, 8
        %s619 = scalar_lea.vmem %s5, %s618
      $region56: #{se_block_forward.1} parent=47 // pred_fallthru
        _
    $region48: #{se_block_forward.1} parent=5 // pred_fallthru
      _
  $region6: #{se_block_forward.1} parent=0 // loop_footer
    %s16 = sadd.s32 1, %s12
  $region7: #{se_block_forward.1} parent=0 // loop_footer_branch
    %11 = sbr.rel target = $region3
  $region8: #{se_block_forward.1} parent=0 // loop_exit
    _

</llo_original>
